<compile_context>
chip_gen: v7x
topology: tpu7x:2x2x1
jax: 0.10.0
libtpu: 0.0.40
codegen_flags: <defaults>
</compile_context>

<pallas_src>
import functools

import jax
import jax.numpy as jnp
from jax.experimental import pallas as pl
from jax.experimental.pallas import tpu as pltpu


_VMEM_LIMIT_BYTES = 32 * 1024 * 1024
_TARGET_TILE_BYTES = 1 << 20  # ~1 MiB per pipelined input buffer


def _round_up(x, m):
    return (x + m - 1) // m * m


def _tile_and_pad(n, rows, itemsize=4, max_tile_n=8192):
    """Pick a lane tile (multiple of 128) along N and the padded N extent."""
    n128 = max(128, _round_up(n, 128))
    cap_bytes = max(128, ((_TARGET_TILE_BYTES // max(1, rows * itemsize)) // 128) * 128)
    cap_user = max(128, (int(max_tile_n) // 128) * 128)
    tile = min(n128, cap_bytes, cap_user)
    n_pad = _round_up(max(n, 1), tile)
    return tile, n_pad


def _smooth_l1(pred_ref, tgt_ref, cw_ref, *, sigma, apply_cw):
    """Elementwise smooth-L1 on the current [B, C, T] tile, in float32."""
    diff = pred_ref[...].astype(jnp.float32) - tgt_ref[...].astype(jnp.float32)
    if apply_cw:
        # (1, C, 1): sublane-aligned code weights, broadcast along lanes.
        diff = diff * cw_ref[...].astype(jnp.float32)
    sigma2 = sigma * sigma
    abs_diff = jnp.abs(diff)
    return jnp.where(abs_diff <= 1.0 / sigma2,
                     (0.5 * sigma2) * diff * diff,
                     abs_diff - 0.5 / sigma2)


def _sum_kernel(pred_ref, tgt_ref, cw_ref, out_ref, acc_ref, *, sigma, apply_cw):
    i = pl.program_id(0)

    @pl.when(i == 0)
    def _init():
        acc_ref[0, 0] = jnp.float32(0.0)

    loss = _smooth_l1(pred_ref, tgt_ref, cw_ref, sigma=sigma, apply_cw=apply_cw)
    acc_ref[0, 0] += jnp.sum(loss)

    @pl.when(i == pl.num_programs(0) - 1)
    def _finalize():
        out_ref[0, 0] = acc_ref[0, 0]


def _codewise_kernel(pred_ref, tgt_ref, cw_ref, out_ref, *, sigma, apply_cw):
    loss = _smooth_l1(pred_ref, tgt_ref, cw_ref, sigma=sigma, apply_cw=apply_cw)
    out_ref[...] = loss.astype(out_ref.dtype)


def _codewise_weighted_kernel(pred_ref, tgt_ref, cw_ref, w_ref, out_ref, *,
                              sigma, apply_cw):
    loss = _smooth_l1(pred_ref, tgt_ref, cw_ref, sigma=sigma, apply_cw=apply_cw)
    w = w_ref[...].astype(jnp.float32)[:, None, :]  # [B, 1, T] sublane broadcast
    out_ref[...] = (loss * w).astype(out_ref.dtype)


def _scale_by_total_kernel(total_ref, w_ref, out_ref):
    # out[B, T] = weights[B, T] * scalar_total  (scalar lives in SMEM)
    out_ref[...] = (w_ref[...].astype(jnp.float32) * total_ref[0, 0]).astype(out_ref.dtype)


class FCOSRegressionSmoothL1Loss:
    """JAX/Pallas port of FCOS_resgression_Smooth_L1Loss (forward only)."""

    def __init__(self, sigma=3.0, code_weights=None, codewise=False, max_tile_n=8192):
        self._sigma = float(sigma)
        self._code_weights = (None if code_weights is None
                              else jnp.asarray(code_weights, dtype=jnp.float32))
        self._codewise = codewise
        self._max_tile_n = int(max_tile_n)

    def __call__(self, prediction_tensor, target_tensor, weights=None):
        B, N, C = prediction_tensor.shape
        dtype = prediction_tensor.dtype

        # Lane-dense layout: long axis (N) last -> [B, C, N] (wrapper plumbing).
        pred_t = jnp.transpose(prediction_tensor, (0, 2, 1))
        tgt_t = jnp.transpose(target_tensor, (0, 2, 1))

        apply_cw = self._code_weights is not None
        if apply_cw:
            cw = self._code_weights.reshape(1, C, 1)
        else:
            cw = jnp.ones((1, C, 1), dtype=jnp.float32)  # never read (apply_cw=False)

        tile_n, n_pad = _tile_and_pad(N, rows=B * C, itemsize=4,
                                      max_tile_n=self._max_tile_n)
        pad = n_pad - N
        if pad:
            # Zero padding -> zero diff -> zero loss: never affects the global
            # sum; padded codewise columns are sliced off below.
            pred_t = jnp.pad(pred_t, ((0, 0), (0, 0), (0, pad)))
            tgt_t = jnp.pad(tgt_t, ((0, 0), (0, 0), (0, pad)))
        grid = (n_pad // tile_n,)

        in3_spec = pl.BlockSpec((B, C, tile_n), lambda i: (0, 0, i))
        cw_spec = pl.BlockSpec((1, C, 1), lambda i: (0, 0, 0))
        w_spec = pl.BlockSpec((B, tile_n), lambda i: (0, i))

        if self._codewise:
            if weights is None:
                kernel = functools.partial(_codewise_kernel,
                                           sigma=self._sigma, apply_cw=apply_cw)
                operands = (pred_t, tgt_t, cw)
                in_specs = [in3_spec, in3_spec, cw_spec]
            else:
                w_p = weights.astype(dtype)
                if pad:
                    w_p = jnp.pad(w_p, ((0, 0), (0, pad)))
                kernel = functools.partial(_codewise_weighted_kernel,
                                           sigma=self._sigma, apply_cw=apply_cw)
                operands = (pred_t, tgt_t, cw, w_p)
                in_specs = [in3_spec, in3_spec, cw_spec, w_spec]

            out_t = pl.pallas_call(
                kernel,
                out_shape=jax.ShapeDtypeStruct((B, C, n_pad), dtype),
                grid=grid,
                in_specs=in_specs,
                out_specs=in3_spec,
                compiler_params=pltpu.CompilerParams(
                    dimension_semantics=("parallel",),
                    vmem_limit_bytes=_VMEM_LIMIT_BYTES),
            )(*operands)
            # Back to the module's [B, N, C] layout.
            return jnp.transpose(out_t[:, :, :N], (0, 2, 1))

        # ---- sum variant: global f32 reduction, then optional weight scale ----
        kernel = functools.partial(_sum_kernel, sigma=self._sigma, apply_cw=apply_cw)
        total = pl.pallas_call(
            kernel,
            out_shape=jax.ShapeDtypeStruct((1, 1), jnp.float32),
            grid=grid,
            in_specs=[in3_spec, in3_spec, cw_spec],
            out_specs=pl.BlockSpec(memory_space=pltpu.MemorySpace.SMEM),
            scratch_shapes=[pltpu.SMEM((1, 1), jnp.float32)],
            compiler_params=pltpu.CompilerParams(
                dimension_semantics=("arbitrary",),  # carried scalar accumulator
                vmem_limit_bytes=_VMEM_LIMIT_BYTES),
        )(pred_t, tgt_t, cw)

        if weights is None:
            return total[0, 0].astype(dtype)

        w_p = weights.astype(dtype)
        if pad:
            w_p = jnp.pad(w_p, ((0, 0), (0, pad)))
        out = pl.pallas_call(
            _scale_by_total_kernel,
            out_shape=jax.ShapeDtypeStruct((B, n_pad), dtype),
            grid=grid,
            in_specs=[pl.BlockSpec(memory_space=pltpu.MemorySpace.SMEM), w_spec],
            out_specs=w_spec,
            compiler_params=pltpu.CompilerParams(
                dimension_semantics=("parallel",),
                vmem_limit_bytes=_VMEM_LIMIT_BYTES),
        )(total, w_p)
        return out[:, :N]


def _reference(pred, tgt, weights, sigma=3.0, code_weights=None, codewise=False):
    diff = pred - tgt
    if code_weights is not None:
        diff = jnp.asarray(code_weights, pred.dtype).reshape(1, 1, -1) * diff
    abs_diff = jnp.abs(diff)
    lt = (abs_diff <= 1.0 / sigma ** 2).astype(abs_diff.dtype)
    loss = lt * 0.5 * (abs_diff * sigma) ** 2 + (abs_diff - 0.5 / sigma ** 2) * (1.0 - lt)
    if codewise:
        out = loss
        if weights is not None:
            out = out * weights[..., None]
        return out
    out = jnp.sum(loss)
    if weights is not None:
        out = out * weights
    return out


if __name__ == "__main__":
    key = jax.random.PRNGKey(0)
    k1, k2, k3 = jax.random.split(key, 3)

    B, N, C = 2, 8, 4  # batch, num positive pixels, code size (l, t, r, b)
    pred = jax.random.normal(k1, (B, N, C), dtype=jnp.float32)
    tgt = jax.random.normal(k2, (B, N, C), dtype=jnp.float32)
    weights = jax.random.uniform(k3, (B, N), dtype=jnp.float32)

    # sum path with weights -> [B, N]
    loss_fn = FCOSRegressionSmoothL1Loss(sigma=3.0)
    out = jax.block_until_ready(loss_fn(pred, tgt, weights))
    ref = _reference(pred, tgt, weights, sigma=3.0)
    assert out.shape == (B, N), out.shape
    assert jnp.allclose(out, ref, rtol=1e-5, atol=1e-5)

    # sum path without weights -> scalar
    out_s = jax.block_until_ready(loss_fn(pred, tgt, None))
    ref_s = _reference(pred, tgt, None, sigma=3.0)
    assert jnp.allclose(out_s, ref_s, rtol=1e-5, atol=1e-5)

    # codewise path with code_weights -> [B, N, C]
    cwts = [1.0, 2.0, 0.5, 1.5]
    loss_fn_cw = FCOSRegressionSmoothL1Loss(sigma=3.0, code_weights=cwts, codewise=True)
    out_cw = jax.block_until_ready(loss_fn_cw(pred, tgt, weights))
    ref_cw = _reference(pred, tgt, weights, sigma=3.0, code_weights=cwts, codewise=True)
    assert out_cw.shape == (B, N, C)
    assert jnp.allclose(out_cw, ref_cw, rtol=1e-5, atol=1e-5)

    # multi-tile grid + remainder padding (N not a multiple of the tile)
    N2 = 300
    p2 = jax.random.normal(k1, (B, N2, C), dtype=jnp.float32)
    t2 = jax.random.normal(k2, (B, N2, C), dtype=jnp.float32)
    w2 = jax.random.uniform(k3, (B, N2), dtype=jnp.float32)
    loss_small_tile = FCOSRegressionSmoothL1Loss(sigma=3.0, max_tile_n=128)
    out2 = jax.block_until_ready(loss_small_tile(p2, t2, w2))
    ref2 = _reference(p2, t2, w2, sigma=3.0)
    assert jnp.allclose(out2, ref2, rtol=1e-4, atol=1e-4)

    print("KERNEL_OK")
</pallas_src>

<mosaic_0001>
module attributes {stable_mosaic.version = 11 : i64} {
  func.func @_sum_kernel(%arg0: i32, %arg1: memref<2x4x128xf32, #tpu.memory_space<vmem>>, %arg2: memref<2x4x128xf32, #tpu.memory_space<vmem>>, %arg3: memref<1x4x1xf32, #tpu.memory_space<vmem>>, %arg4: memref<1x1xf32, #tpu.memory_space<smem>>, %arg5: memref<1x1xf32, #tpu.memory_space<smem>>) attributes {dimension_semantics = [#tpu.dimension_semantics<arbitrary>], iteration_bounds = array<i64: 1>, scalar_prefetch = 0 : i64, scratch_operands = 1 : i64, tpu.core_type = #tpu.core_type<tc>, window_params = [{transform_indices = @transform_0, window_bounds = array<i64: 2, 4, 128>}, {transform_indices = @transform_1, window_bounds = array<i64: 2, 4, 128>}, {pipeline_mode = #tpu.pipeline_mode<synchronous>, transform_indices = @transform_2, window_bounds = array<i64: 1, 4, 1>}, {transform_indices = @transform_3, window_bounds = array<i64: 1, 1>}]} {
    %c0_i32 = arith.constant 0 : i32
    %0 = arith.cmpi eq, %arg0, %c0_i32 : i32
    %1 = arith.extui %0 : i1 to i32
    %c0_i32_0 = arith.constant 0 : i32
    %2 = arith.cmpi ne, %1, %c0_i32_0 : i32
    scf.if %2 {
      %cst_15 = arith.constant 0.000000e+00 : f32
      %c0_16 = arith.constant 0 : index
      %c0_17 = arith.constant 0 : index
      %25 = memref.load %arg5[%c0_16, %c0_17] : memref<1x1xf32, #tpu.memory_space<smem>>
      memref.store %cst_15, %arg5[%c0_16, %c0_17] : memref<1x1xf32, #tpu.memory_space<smem>>
    } else {
    }
    %c0 = arith.constant 0 : index
    %c0_1 = arith.constant 0 : index
    %c0_2 = arith.constant 0 : index
    %3 = vector.load %arg1[%c0, %c0_1, %c0_2] : memref<2x4x128xf32, #tpu.memory_space<vmem>>, vector<2x4x128xf32>
    %c0_3 = arith.constant 0 : index
    %c0_4 = arith.constant 0 : index
    %c0_5 = arith.constant 0 : index
    %4 = vector.load %arg2[%c0_3, %c0_4, %c0_5] : memref<2x4x128xf32, #tpu.memory_space<vmem>>, vector<2x4x128xf32>
    %5 = arith.subf %3, %4 : vector<2x4x128xf32>
    %6 = math.absf %5 : vector<2x4x128xf32>
    %cst = arith.constant 0.111111112 : f32
    %7 = vector.broadcast %cst : f32 to vector<2x4x128xf32>
    %8 = arith.cmpf ole, %6, %7 : vector<2x4x128xf32>
    %cst_6 = arith.constant 4.500000e+00 : f32
    %9 = vector.broadcast %cst_6 : f32 to vector<2x4x128xf32>
    %10 = arith.mulf %9, %5 : vector<2x4x128xf32>
    %11 = arith.mulf %10, %5 : vector<2x4x128xf32>
    %cst_7 = arith.constant 0.055555556 : f32
    %12 = vector.broadcast %cst_7 : f32 to vector<2x4x128xf32>
    %13 = arith.subf %6, %12 : vector<2x4x128xf32>
    %14 = arith.select %8, %11, %13 : vector<2x4x128xi1>, vector<2x4x128xf32>
    %c0_8 = arith.constant 0 : index
    %c0_9 = arith.constant 0 : index
    %15 = memref.load %arg5[%c0_8, %c0_9] : memref<1x1xf32, #tpu.memory_space<smem>>
    %16 = vector.shape_cast %14 : vector<2x4x128xf32> to vector<1x2x4x128xf32>
    %cst_10 = arith.constant dense<0.000000e+00> : vector<1xf32>
    %17 = vector.multi_reduction <add>, %16, %cst_10 [1, 2, 3] : vector<1x2x4x128xf32> to vector<1xf32>
    %18 = vector.shape_cast %17 : vector<1xf32> to vector<1x1x1x1xf32>
    %19 = vector.extract %18[0, 0, 0, 0] : f32 from vector<1x1x1x1xf32>
    %20 = arith.addf %15, %19 : f32
    %c0_11 = arith.constant 0 : index
    %c0_12 = arith.constant 0 : index
    %21 = memref.load %arg5[%c0_11, %c0_12] : memref<1x1xf32, #tpu.memory_space<smem>>
    memref.store %20, %arg5[%c0_11, %c0_12] : memref<1x1xf32, #tpu.memory_space<smem>>
    %c0_i32_13 = arith.constant 0 : i32
    %22 = arith.cmpi eq, %arg0, %c0_i32_13 : i32
    %23 = arith.extui %22 : i1 to i32
    %c0_i32_14 = arith.constant 0 : i32
    %24 = arith.cmpi ne, %23, %c0_i32_14 : i32
    scf.if %24 {
      %c0_15 = arith.constant 0 : index
      %c0_16 = arith.constant 0 : index
      %25 = memref.load %arg5[%c0_15, %c0_16] : memref<1x1xf32, #tpu.memory_space<smem>>
      %c0_17 = arith.constant 0 : index
      %c0_18 = arith.constant 0 : index
      %26 = memref.load %arg4[%c0_17, %c0_18] : memref<1x1xf32, #tpu.memory_space<smem>>
      memref.store %25, %arg4[%c0_17, %c0_18] : memref<1x1xf32, #tpu.memory_space<smem>>
    } else {
    }
    return
  }
  func.func @transform_0(%arg0: i32) -> (i32, i32, i32) {
    %c0_i32 = arith.constant 0 : i32
    %c0_i32_0 = arith.constant 0 : i32
    %c0_i32_1 = arith.constant 0 : i32
    return %c0_i32, %c0_i32_0, %arg0 : i32, i32, i32
  }
  func.func @transform_1(%arg0: i32) -> (i32, i32, i32) {
    %c0_i32 = arith.constant 0 : i32
    %c0_i32_0 = arith.constant 0 : i32
    %c0_i32_1 = arith.constant 0 : i32
    return %c0_i32, %c0_i32_0, %arg0 : i32, i32, i32
  }
  func.func @transform_2(%arg0: i32) -> (i32, i32, i32) {
    %c0_i32 = arith.constant 0 : i32
    %c0_i32_0 = arith.constant 0 : i32
    %c0_i32_1 = arith.constant 0 : i32
    %c0_i32_2 = arith.constant 0 : i32
    return %c0_i32, %c0_i32_0, %c0_i32_1 : i32, i32, i32
  }
  func.func @transform_3(%arg0: i32) -> (i32, i32) {
    %c0_i32 = arith.constant 0 : i32
    %c0_i32_0 = arith.constant 0 : i32
    %c0_i32_1 = arith.constant 0 : i32
    return %c0_i32, %c0_i32_0 : i32, i32
  }
}

</mosaic_0001>

<llo_original>
// kernel: tpu_custom_call.1
$region0: #{tpu_custom_call.1}
  #allocation0 [shape = 'u32[]', space=smem, size = 0x4, offset = 0x4, fixed_abs, tag = 'smem constant byte address 0x4 - core index']
  #allocation1 [shape = 'u32[144,128]{1,0:T(1,128)}', space=vmem, size = 0x12000, scoped, tag = 'internal scratch']
  #allocation2 [shape = 'f32[1,1]{1,0:T(1,128)}', space=smem, size = 0x200, scoped, tag = 'scratch operand']
  %s0 = inlined_call_operand.hbm [shape: f32[2,4,128], index: 0, kind: input, shape index: {}]
  %s1 = inlined_call_operand.vmem [shape: f32[2,4,128], index: 1, kind: input, shape index: {}]
  %s2 = inlined_call_operand.vmem [shape: f32[1,4,1], index: 2, kind: input, shape index: {}]
  %s3 = inlined_call_operand.hbm [shape: f32[1,1], index: 3, kind: output, shape index: {}]
  %s4 = sld [smem:[#allocation0]]
  $region34: #{tpu_custom_call.1} parent=0
    _
  %s6 = ssub.s32 1, %s4
  %s7 = scalar_select 0, %s6, %s4
  $region1: #{tpu_custom_call.1} parent=0
    #allocation3 [shape = 'u8[4096]{0}', space=vmem, size = 0x1000, scoped, tag = 'input window, operand 0, single buffered']
    #allocation4 [shape = 's32[1]{0}', space=sflag, size = 0x4, scoped, tag = 'scoped memory for tpu_custom_call.1']
    #allocation5 [shape = 's32[1]{0}', space=sflag, size = 0x4, scoped, tag = 'scoped memory for tpu_custom_call.1']
    #allocation6 [shape = 'u8[512]{0}', space=smem, size = 0x200, scoped, tag = 'output window, operand 0, single buffered']
    %8 = vsyncpa [#allocation4], 0
    %9 = vsyncpa [#allocation5], 0
    // Predicated region
    $region2: #{tpu_custom_call.1} parent=1 // pred_check
      _
    $region3: #{tpu_custom_call.1} parent=1 // pred_check_branch
      %11 = sbr.rel (0) target = $region5
    $region4: #{tpu_custom_call.1} parent=1 // pred_region
      %s13 = ssub.s32 128, 128
      %14 = vsyncadd [#allocation4], %s13
      %s15 = sshll.u32 [#allocation3], 4
      %s16 = int_to_ptr.vmem [resolvable:$true] %s15
      %21 = dma.hbm_to_vmem [thread:$0]  %s0, 128, %s16, [#allocation4], 64, 64, 4
    $region5: #{tpu_custom_call.1} parent=1 // pred_fallthru
      _
    // Predicated region
    $region6: #{tpu_custom_call.1} parent=1 // pred_check
      _
    $region7: #{tpu_custom_call.1} parent=1 // pred_check_branch
      %23 = sbr.rel (0) target = $region9
    $region8: #{tpu_custom_call.1} parent=1 // pred_region
      _
    $region9: #{tpu_custom_call.1} parent=1 // pred_fallthru
      _
    // Predicated region
    $region10: #{tpu_custom_call.1} parent=1 // pred_check
      _
    $region11: #{tpu_custom_call.1} parent=1 // pred_check_branch
      %25 = sbr.rel (0) target = $region13
    $region12: #{tpu_custom_call.1} parent=1 // pred_region
      _
    $region13: #{tpu_custom_call.1} parent=1 // pred_fallthru
      _
    // Predicated region
    $region14: #{tpu_custom_call.1} parent=1 // pred_check
      _
    $region15: #{tpu_custom_call.1} parent=1 // pred_check_branch
      %27 = sbr.rel (0) target = $region17
    $region16: #{tpu_custom_call.1} parent=1 // pred_region
      %28 = dma.done [#allocation4], 128
    $region17: #{tpu_custom_call.1} parent=1 // pred_fallthru
      _
    %p29 = scmp.eq.s32.totalorder 0, 0
    // Predicated region
    $region18: #{tpu_custom_call.1} parent=1 // pred_check
      %p30 = pneg %p29
    $region19: #{tpu_custom_call.1} parent=1 // pred_check_branch
      %32 = sbr.rel (%p30) target = $region21
    $region20: #{tpu_custom_call.1} parent=1 // pred_region
      %s33 = scalar_lea.smem [#allocation2], 0
      %34 = sst [smem:[%s33]] 0.0
    $region21: #{tpu_custom_call.1} parent=1 // pred_fallthru
      _
    %v35 = vld [vmem:[#allocation3] sm:$0xf]
    %v36 = vld [vmem:[#allocation3 + $0x4] sm:$0xf]
    %v37 = vld [vmem:[%s1] sm:$0xf]
    %v38 = vld [vmem:[%s1 + $0x4] sm:$0xf]
    %v39 = vsub.f32 %v35, %v37
    %v40 = vsub.f32 %v36, %v38
    %v41 = vand.u32 2147483647, %v39
    %v42 = vand.u32 2147483647, %v40
    %vm43 = vcmp.le.f32.partialorder %v41, 0.11111111
    %vm44 = vcmp.le.f32.partialorder %v42, 0.11111111
    %v45 = vmul.f32 %v39, 4.5
    %v46 = vmul.f32 %v40, 4.5
    %v47 = vmul.f32 %v45, %v39
    %v48 = vmul.f32 %v46, %v40
    %v49 = vsub.f32 %v41, 0.055555556
    %v50 = vsub.f32 %v42, 0.055555556
    %v51 = vsel %vm43, %v47, %v49
    %v52 = vsel %vm44, %v48, %v50
    %s53 = sld [smem:[#allocation2]]
    %vm54 = vcmask 1043456
    %v55 = vsel %vm54, %v51, 0.0
    %v56 = vsel %vm54, %v52, 0.0
    %v57 = vadd.f32 %v55, %v56
    %58 = vadd.xlane.f32.xlu0 %v57
    %v59 = vpop.xlane.xlu0 %58
    %v60 = vrot.slane %v59, 4
    %v61 = vadd.f32 %v59, %v60
    %v62 = vrot.slane %v61, 2
    %v63 = vadd.f32 %v61, %v62
    %v64 = vrot.slane %v63, 1
    %v65 = vadd.f32 %v63, %v64
    %s66 = vtos %v65
    %s67 = sadd.f32 %s53, %s66
    %s68 = scalar_lea.smem [#allocation2], 0
    %69 = sst [smem:[%s68]] %s67
    // Predicated region
    $region22: #{tpu_custom_call.1} parent=1 // pred_check
      %p70 = pneg %p29
    $region23: #{tpu_custom_call.1} parent=1 // pred_check_branch
      %72 = sbr.rel (%p70) target = $region25
    $region24: #{tpu_custom_call.1} parent=1 // pred_region
      %s73 = sld [smem:[#allocation2]]
      %s74 = scalar_lea.smem [#allocation6], 0
      %75 = sst [smem:[%s74]] %s73
    $region25: #{tpu_custom_call.1} parent=1 // pred_fallthru
      _
    // Predicated region
    $region26: #{tpu_custom_call.1} parent=1 // pred_check
      _
    $region27: #{tpu_custom_call.1} parent=1 // pred_check_branch
      %77 = sbr.rel (0) target = $region29
    $region28: #{tpu_custom_call.1} parent=1 // pred_region
      %s79 = ssub.s32 16, 16
      %80 = vsyncadd [#allocation5], %s79
      %83 = dma.smem_to_hbm [#allocation6], 16, %s3, [#allocation5]
    $region29: #{tpu_custom_call.1} parent=1 // pred_fallthru
      _
    // Predicated region
    $region30: #{tpu_custom_call.1} parent=1 // pred_check
      _
    $region31: #{tpu_custom_call.1} parent=1 // pred_check_branch
      %85 = sbr.rel (0) target = $region33
    $region32: #{tpu_custom_call.1} parent=1 // pred_region
      %86 = dma.done [#allocation5], 16
    $region33: #{tpu_custom_call.1} parent=1 // pred_fallthru
      _
    %87 = sfence
    %88 = vsyncpa [#allocation4], 1
    %89 = vsyncpa [#allocation5], 1

</llo_original>
